<compile_context>
chip_gen: v7x
topology: tpu7x:2x2x1
jax: 0.10.0
libtpu: 0.0.40
codegen_flags: <defaults>
</compile_context>

<pallas_src>
import math

import jax
import jax.numpy as jnp
from jax import lax
from jax.experimental import pallas as pl
from jax.experimental.pallas import tpu as pltpu


# ---------------------------------------------------------------------------
# helpers
# ---------------------------------------------------------------------------
def _round_up(x, m):
    return ((x + m - 1) // m) * m


def _pick_tile(n):
    """Largest 128-multiple tile dividing n, else the full extent."""
    for t in (256, 128):
        if n % t == 0:
            return t
    return n


def _vmem_params(semantics, tile_bytes):
    # double-buffered tiles + generous headroom, clamped to v7x's 64 MiB physical VMEM
    limit = int(min(max(4 * tile_bytes, 32 * 1024 * 1024), 64 * 1024 * 1024))
    return pltpu.CompilerParams(dimension_semantics=semantics,
                                vmem_limit_bytes=limit)


# ---------------------------------------------------------------------------
# Kernel 1: tiled pairwise squared distances (only needed for the median path)
# ---------------------------------------------------------------------------
def _dists_kernel(xi_ref, xj_ref, dists_ref):
    xi = xi_ref[...]                                                   # (TM, Dp)
    xj = xj_ref[...]                                                   # (TN, Dp)

    sq_i = jnp.sum(xi * xi, axis=-1, keepdims=True)                    # (TM, 1)
    ones_row = jnp.ones((1, xj.shape[-1]), jnp.float32)
    # (1, TN) row of ||x_j||^2 straight from the MXU — no sublane->lane transpose.
    sq_j_row = lax.dot_general(ones_row, xj * xj,
                               (((1,), (1,)), ((), ())),
                               preferred_element_type=jnp.float32)     # (1, TN)
    # contraction on dim 1 of both operands: no materialized xj.T
    gram = lax.dot_general(xi, xj, (((1,), (1,)), ((), ())),
                           preferred_element_type=jnp.float32)         # (TM, TN)

    # gram trick can go epsilon-negative on the diagonal; clamp to match the
    # exact-zero diagonal of the direct (X_i - X_j)^2 computation.
    dists_ref[...] = jnp.maximum(sq_i + sq_j_row - 2.0 * gram, 0.0)


def pairwise_sq_dists(xp):
    n, dp = xp.shape
    tm = _pick_tile(n)
    tn = _pick_tile(n)
    tile_bytes = 4 * 2 * (tm * dp + tn * dp + tm * tn)
    return pl.pallas_call(
        _dists_kernel,
        out_shape=jax.ShapeDtypeStruct((n, n), jnp.float32),
        grid=(n // tm, n // tn),
        in_specs=[
            pl.BlockSpec((tm, dp), lambda i, j: (i, 0)),               # X rows (i block)
            pl.BlockSpec((tn, dp), lambda i, j: (j, 0)),               # X rows (j block)
        ],
        out_specs=pl.BlockSpec((tm, tn), lambda i, j: (i, j)),
        compiler_params=_vmem_params(("parallel", "parallel"), tile_bytes),
    )(xp, xp)


# ---------------------------------------------------------------------------
# Kernel 2: fused k + der.  Recomputes the distance tile from X on the fly
# (no HBM re-read of the (N,N) dists matrix); der accumulated over the i axis.
# ---------------------------------------------------------------------------
def _k_der_kernel(sigma_ref, xj_ref, xi_ref, k_ref, der_ref, acc_kx, acc_rs):
    i = pl.program_id(1)
    last_i = pl.num_programs(1) - 1

    sigma = sigma_ref[0]                                               # SMEM scalar
    inv_2s2 = 0.5 / (sigma * sigma)

    xj = xj_ref[...]                                                   # (TJ, Dp) — der rows
    xi = xi_ref[...]                                                   # (TI, Dp) — reduction block

    # distance tile via gram trick, fully on the MXU
    sq_j = jnp.sum(xj * xj, axis=-1, keepdims=True)                    # (TJ, 1)
    ones_row = jnp.ones((1, xi.shape[-1]), jnp.float32)
    sq_i_row = lax.dot_general(ones_row, xi * xi,
                               (((1,), (1,)), ((), ())),
                               preferred_element_type=jnp.float32)     # (1, TI)
    gram = lax.dot_general(xj, xi, (((1,), (1,)), ((), ())),
                           preferred_element_type=jnp.float32)         # (TJ, TI)
    d2 = jnp.maximum(sq_j + sq_i_row - 2.0 * gram, 0.0)

    k_tile = jnp.exp(-d2 * inv_2s2)                                    # EUP exp, (TJ, TI)
    k_ref[...] = k_tile                                                # k[J, I] (symmetric)

    @pl.when(i == 0)
    def _():
        acc_kx[...] = jnp.zeros_like(acc_kx)
        acc_rs[...] = jnp.zeros_like(acc_rs)

    # k is symmetric: K.T @ X == K @ X and colsum == rowsum (lane reduce, no XLU transpose)
    acc_kx[...] += jnp.dot(k_tile, xi, preferred_element_type=jnp.float32)   # (TJ, Dp)
    acc_rs[...] += jnp.sum(k_tile, axis=-1, keepdims=True)                   # (TJ, 1)

    @pl.when(i == last_i)
    def _():
        inv_s2 = 2.0 * inv_2s2
        der_ref[...] = (acc_kx[...] - xj * acc_rs[...]) * inv_s2


def k_and_der(xp, sigma):
    n, dp = xp.shape
    tj = _pick_tile(n)
    ti = _pick_tile(n)
    sigma_arr = jnp.reshape(jnp.asarray(sigma, jnp.float32), (1,))
    tile_bytes = (4 * 2 * (tj * dp + ti * dp + tj * ti + tj * dp)      # dbl-buffered ins/outs
                  + 4 * (tj * dp + tj * 128))                          # scratch
    return pl.pallas_call(
        _k_der_kernel,
        out_shape=(
            jax.ShapeDtypeStruct((n, n), jnp.float32),                 # k
            jax.ShapeDtypeStruct((n, dp), jnp.float32),                # der (padded lanes)
        ),
        grid=(n // tj, n // ti),                                       # (j parallel, i reduce)
        in_specs=[
            pl.BlockSpec(memory_space=pltpu.MemorySpace.SMEM),         # sigma scalar
            pl.BlockSpec((tj, dp), lambda j, i: (j, 0)),               # X_j (resident over i)
            pl.BlockSpec((ti, dp), lambda j, i: (i, 0)),               # X_i
        ],
        out_specs=(
            pl.BlockSpec((tj, ti), lambda j, i: (j, i)),               # k tile
            pl.BlockSpec((tj, dp), lambda j, i: (j, 0)),               # der (same block over i)
        ),
        scratch_shapes=[
            pltpu.VMEM((tj, dp), jnp.float32),                         # K @ X accumulator
            pltpu.VMEM((tj, 1), jnp.float32),                          # rowsum accumulator
        ],
        compiler_params=_vmem_params(("parallel", "arbitrary"), tile_bytes),
    )(sigma_arr, xp, xp)


# ---------------------------------------------------------------------------
# Forward wrapper (matches RBF(sigma).forward(X, EMA) -> (k, der, sigma))
# ---------------------------------------------------------------------------
def rbf_forward(X, EMA=None, sigma=None):
    X = jnp.asarray(X, jnp.float32)
    n, d = X.shape
    dp = _round_up(d, 128)
    xp = jnp.pad(X, ((0, 0), (0, dp - d))) if dp != d else X           # lane-dense pad; math unchanged

    if sigma is None:
        dists = pairwise_sq_dists(xp)
        # torch.median on a flattened tensor returns the LOWER median for an
        # even element count -> sorted index (numel - 1) // 2.
        # TODO(synk): replace the O(N^2 log N^2) sort with an in-kernel counting
        # (bit-wise binary search) median selection fused with the dists tiles.
        flat = dists.reshape(-1)
        med = jnp.sort(flat)[(flat.shape[0] - 1) // 2]
        h = med / (2.0 * math.log(n + 1))
        sig = jnp.sqrt(h)
        if EMA is not None:
            sig = EMA[1] * sig + (1.0 - EMA[1]) * EMA[0]
    else:
        sig = jnp.asarray(sigma, jnp.float32)

    k, der_p = k_and_der(xp, sig)
    der = der_p[:, :d]                                                 # strip lane padding
    return k, der, sig


# ---------------------------------------------------------------------------
# Pure-JAX reference (mirrors the PyTorch forward) for a sanity check
# ---------------------------------------------------------------------------
def _rbf_reference(X, EMA=None, sigma=None):
    X = jnp.asarray(X, jnp.float32)
    d = X[:, None, :] - X[None, :, :]
    dists = jnp.sum(d ** 2, axis=-1)
    if sigma is None:
        flat = dists.reshape(-1)
        med = jnp.sort(flat)[(flat.shape[0] - 1) // 2]
        h = med / (2.0 * math.log(X.shape[0] + 1))
        sig = jnp.sqrt(h)
        if EMA is not None:
            sig = EMA[1] * sig + (1.0 - EMA[1]) * EMA[0]
    else:
        sig = jnp.asarray(sigma, jnp.float32)
    k = jnp.exp(-dists / (2.0 * sig ** 2))
    der = jnp.sum(d * k[:, :, None], axis=0) / (sig ** 2)
    return k, der, sig


if __name__ == "__main__":
    key = jax.random.PRNGKey(0)
    kx, _ = jax.random.split(key)

    N, D = 64, 32                       # particles x parameter dimension
    X = jax.random.normal(kx, (N, D), dtype=jnp.float32)
    EMA = jnp.array([0.3, 0.9], dtype=jnp.float32)   # (prev_sigma, blend_factor)

    # sigma=None path (median bandwidth), sigma=None + EMA blend, fixed-sigma path
    cases = [dict(EMA=None, sigma=None),
             dict(EMA=EMA, sigma=None),
             dict(EMA=None, sigma=1.5)]

    ok = True
    for cfg in cases:
        k, der, sig = rbf_forward(X, **cfg)
        jax.block_until_ready((k, der, sig))
        rk, rder, rsig = _rbf_reference(X, **cfg)
        assert k.shape == (N, N) and der.shape == (N, D)
        ok &= bool(jnp.allclose(k, rk, rtol=2e-3, atol=2e-3))
        ok &= bool(jnp.allclose(der, rder, rtol=2e-3, atol=2e-3))
        ok &= bool(jnp.allclose(sig, rsig, rtol=2e-3, atol=2e-3))

    assert ok, "Pallas RBF output mismatch vs. reference"
    print("KERNEL_OK")
</pallas_src>

<mosaic_0001>
module attributes {stable_mosaic.version = 11 : i64} {
  func.func @_dists_kernel(%arg0: i32, %arg1: i32, %arg2: memref<64x128xf32, #tpu.memory_space<vmem>>, %arg3: memref<64x128xf32, #tpu.memory_space<vmem>>, %arg4: memref<64x64xf32, #tpu.memory_space<vmem>>) attributes {dimension_semantics = [#tpu.dimension_semantics<parallel>, #tpu.dimension_semantics<parallel>], iteration_bounds = array<i64: 1, 1>, scalar_prefetch = 0 : i64, scratch_operands = 0 : i64, tpu.core_type = #tpu.core_type<tc>, window_params = [{transform_indices = @transform_0, window_bounds = array<i64: 64, 128>}, {transform_indices = @transform_1, window_bounds = array<i64: 64, 128>}, {transform_indices = @transform_2, window_bounds = array<i64: 64, 64>}]} {
    %c0 = arith.constant 0 : index
    %c0_0 = arith.constant 0 : index
    %0 = vector.load %arg2[%c0, %c0_0] : memref<64x128xf32, #tpu.memory_space<vmem>>, vector<64x128xf32>
    %c0_1 = arith.constant 0 : index
    %c0_2 = arith.constant 0 : index
    %1 = vector.load %arg3[%c0_1, %c0_2] : memref<64x128xf32, #tpu.memory_space<vmem>>, vector<64x128xf32>
    %2 = arith.mulf %0, %0 : vector<64x128xf32>
    %cst = arith.constant dense<0.000000e+00> : vector<64xf32>
    %3 = vector.multi_reduction <add>, %2, %cst [1] : vector<64x128xf32> to vector<64xf32>
    %4 = vector.shape_cast %3 : vector<64xf32> to vector<64x1xf32>
    %cst_3 = arith.constant 1.000000e+00 : f32
    %5 = vector.broadcast %cst_3 : f32 to vector<1x128xf32>
    %6 = arith.mulf %1, %1 : vector<64x128xf32>
    %cst_4 = arith.constant dense<0.000000e+00> : vector<1x64xf32>
    %7 = tpu.matmul %5, %6, %cst_4 {dimension_numbers = #tpu.dot_dimension_numbers<[1], [1], [0], [0], [0, 0, 1, 0], [], []>} : vector<1x128xf32>, vector<64x128xf32>, vector<1x64xf32> -> vector<1x64xf32>
    %cst_5 = arith.constant dense<0.000000e+00> : vector<64x64xf32>
    %8 = tpu.matmul %0, %1, %cst_5 {dimension_numbers = #tpu.dot_dimension_numbers<[1], [1], [0], [0], [0, 0, 1, 0], [], []>} : vector<64x128xf32>, vector<64x128xf32>, vector<64x64xf32> -> vector<64x64xf32>
    %9 = vector.broadcast %4 : vector<64x1xf32> to vector<64x64xf32>
    %10 = vector.broadcast %7 : vector<1x64xf32> to vector<64x64xf32>
    %11 = arith.addf %9, %10 : vector<64x64xf32>
    %cst_6 = arith.constant 2.000000e+00 : f32
    %12 = vector.broadcast %cst_6 : f32 to vector<64x64xf32>
    %13 = arith.mulf %12, %8 : vector<64x64xf32>
    %14 = arith.subf %11, %13 : vector<64x64xf32>
    %cst_7 = arith.constant 0.000000e+00 : f32
    %15 = vector.broadcast %cst_7 : f32 to vector<64x64xf32>
    %16 = arith.maximumf %14, %15 : vector<64x64xf32>
    %c0_8 = arith.constant 0 : index
    %c0_9 = arith.constant 0 : index
    %17 = vector.load %arg4[%c0_8, %c0_9] : memref<64x64xf32, #tpu.memory_space<vmem>>, vector<64x64xf32>
    tpu.vector_store %arg4[%c0_8, %c0_9], %16 {strides = array<i32>} : memref<64x64xf32, #tpu.memory_space<vmem>>, vector<64x64xf32>,
    return
  }
  func.func @transform_0(%arg0: i32, %arg1: i32) -> (i32, i32) {
    %c0_i32 = arith.constant 0 : i32
    %c0_i32_0 = arith.constant 0 : i32
    return %arg0, %c0_i32 : i32, i32
  }
  func.func @transform_1(%arg0: i32, %arg1: i32) -> (i32, i32) {
    %c0_i32 = arith.constant 0 : i32
    %c0_i32_0 = arith.constant 0 : i32
    return %arg1, %c0_i32 : i32, i32
  }
  func.func @transform_2(%arg0: i32, %arg1: i32) -> (i32, i32) {
    %c0_i32 = arith.constant 0 : i32
    return %arg0, %arg1 : i32, i32
  }
}

</mosaic_0001>

<llo_original>
// kernel: tpu_custom_call.1
$region0: #{tpu_custom_call.1}
  #allocation0 [shape = 'u32[]', space=smem, size = 0x4, offset = 0x4, fixed_abs, tag = 'smem constant byte address 0x4 - core index']
  #allocation1 [shape = 'u32[144,128]{1,0:T(1,128)}', space=vmem, size = 0x12000, scoped, tag = 'internal scratch']
  %s0 = inlined_call_operand.hbm [shape: f32[64,128], index: 0, kind: input, shape index: {}]
  %s1 = inlined_call_operand.hbm [shape: f32[64,128], index: 1, kind: input, shape index: {}]
  %s2 = inlined_call_operand.hbm [shape: f32[64,64], index: 2, kind: output, shape index: {}]
  %s3 = sld [smem:[#allocation0]]
  $region26: #{tpu_custom_call.1} parent=0
    _
  %s5 = ssub.s32 1, %s3
  %s6 = scalar_select 0, %s5, %s3
  $region1: #{tpu_custom_call.1} parent=0
    #allocation2 [shape = 'u8[32768]{0}', space=vmem, size = 0x8000, scoped, tag = 'input window, operand 0, single buffered']
    #allocation3 [shape = 's32[1]{0}', space=sflag, size = 0x4, scoped, tag = 'scoped memory for tpu_custom_call.1']
    #allocation4 [shape = 's32[1]{0}', space=sflag, size = 0x4, scoped, tag = 'scoped memory for tpu_custom_call.1']
    #allocation5 [shape = 'u8[32768]{0}', space=vmem, size = 0x8000, scoped, tag = 'input window, operand 1, single buffered']
    #allocation6 [shape = 's32[1]{0}', space=sflag, size = 0x4, scoped, tag = 'scoped memory for tpu_custom_call.1']
    #allocation7 [shape = 'u8[32768]{0}', space=vmem, size = 0x8000, scoped, tag = 'output window, operand 0, single buffered']
    %7 = vsyncpa [#allocation3], 0
    %8 = vsyncpa [#allocation6], 0
    %9 = vsyncpa [#allocation4], 0
    // Predicated region
    $region2: #{tpu_custom_call.1} parent=1 // pred_check
      _
    $region3: #{tpu_custom_call.1} parent=1 // pred_check_branch
      %11 = sbr.rel (0) target = $region5
    $region4: #{tpu_custom_call.1} parent=1 // pred_region
      %s13 = ssub.s32 1024, 1024
      %14 = vsyncadd [#allocation3], %s13
      %s15 = sshll.u32 [#allocation2], 4
      %s16 = int_to_ptr.vmem [resolvable:$true] %s15
      %21 = dma.hbm_to_vmem [thread:$0]  %s0, 1024, %s16, [#allocation3], 128, 128, 8
    $region5: #{tpu_custom_call.1} parent=1 // pred_fallthru
      _
    // Predicated region
    $region6: #{tpu_custom_call.1} parent=1 // pred_check
      _
    $region7: #{tpu_custom_call.1} parent=1 // pred_check_branch
      %23 = sbr.rel (0) target = $region9
    $region8: #{tpu_custom_call.1} parent=1 // pred_region
      %s25 = ssub.s32 1024, 1024
      %26 = vsyncadd [#allocation6], %s25
      %s27 = sshll.u32 [#allocation5], 4
      %s28 = int_to_ptr.vmem [resolvable:$true] %s27
      %33 = dma.hbm_to_vmem [thread:$0]  %s1, 1024, %s28, [#allocation6], 128, 128, 8
    $region9: #{tpu_custom_call.1} parent=1 // pred_fallthru
      _
    // Predicated region
    $region10: #{tpu_custom_call.1} parent=1 // pred_check
      _
    $region11: #{tpu_custom_call.1} parent=1 // pred_check_branch
      %35 = sbr.rel (0) target = $region13
    $region12: #{tpu_custom_call.1} parent=1 // pred_region
      %36 = dma.done [#allocation3], 1024
    $region13: #{tpu_custom_call.1} parent=1 // pred_fallthru
      _
    // Predicated region
    $region14: #{tpu_custom_call.1} parent=1 // pred_check
      _
    $region15: #{tpu_custom_call.1} parent=1 // pred_check_branch
      %38 = sbr.rel (0) target = $region17
    $region16: #{tpu_custom_call.1} parent=1 // pred_region
      %39 = dma.done [#allocation6], 1024
    $region17: #{tpu_custom_call.1} parent=1 // pred_fallthru
      _
    %v40 = vld [vmem:[#allocation2] sm:$0xff]
    %v41 = vld [vmem:[#allocation2 + $0x8] sm:$0xff]
    %v42 = vld [vmem:[#allocation2 + $0x10] sm:$0xff]
    %v43 = vld [vmem:[#allocation2 + $0x18] sm:$0xff]
    %v44 = vld [vmem:[#allocation2 + $0x20] sm:$0xff]
    %v45 = vld [vmem:[#allocation2 + $0x28] sm:$0xff]
    %v46 = vld [vmem:[#allocation2 + $0x30] sm:$0xff]
    %v47 = vld [vmem:[#allocation2 + $0x38] sm:$0xff]
    %v48 = vld [vmem:[#allocation5] sm:$0xff]
    %v49 = vld [vmem:[#allocation5 + $0x8] sm:$0xff]
    %v50 = vld [vmem:[#allocation5 + $0x10] sm:$0xff]
    %v51 = vld [vmem:[#allocation5 + $0x18] sm:$0xff]
    %v52 = vld [vmem:[#allocation5 + $0x20] sm:$0xff]
    %v53 = vld [vmem:[#allocation5 + $0x28] sm:$0xff]
    %v54 = vld [vmem:[#allocation5 + $0x30] sm:$0xff]
    %v55 = vld [vmem:[#allocation5 + $0x38] sm:$0xff]
    %v56 = vmul.f32 %v40, %v40
    %v57 = vmul.f32 %v41, %v41
    %v58 = vmul.f32 %v42, %v42
    %v59 = vmul.f32 %v43, %v43
    %v60 = vmul.f32 %v44, %v44
    %v61 = vmul.f32 %v45, %v45
    %v62 = vmul.f32 %v46, %v46
    %v63 = vmul.f32 %v47, %v47
    %64 = vadd.xlane.f32.xlu0 %v56
    %v65 = vpop.xlane.xlu0 %64
    %66 = vadd.xlane.f32.xlu0 %v57
    %v67 = vpop.xlane.xlu0 %66
    %68 = vadd.xlane.f32.xlu0 %v58
    %v69 = vpop.xlane.xlu0 %68
    %70 = vadd.xlane.f32.xlu0 %v59
    %v71 = vpop.xlane.xlu0 %70
    %72 = vadd.xlane.f32.xlu0 %v60
    %v73 = vpop.xlane.xlu0 %72
    %74 = vadd.xlane.f32.xlu0 %v61
    %v75 = vpop.xlane.xlu0 %74
    %76 = vadd.xlane.f32.xlu0 %v62
    %v77 = vpop.xlane.xlu0 %76
    %78 = vadd.xlane.f32.xlu0 %v63
    %v79 = vpop.xlane.xlu0 %78
    %v80 = vmul.f32 %v48, %v48
    %v81 = vmul.f32 %v49, %v49
    %v82 = vmul.f32 %v50, %v50
    %v83 = vmul.f32 %v51, %v51
    %v84 = vmul.f32 %v52, %v52
    %v85 = vmul.f32 %v53, %v53
    %v86 = vmul.f32 %v54, %v54
    %v87 = vmul.f32 %v55, %v55
    %88 = vmatprep.subr.mxu0 0.0
    %89 = vmatpush1.xpose.msra.mxu0 %v80
    %90 = vmatprep.subr.mxu0 0.0
    %91 = vmatpush1.xpose.msra.mxu0 %v81
    %92 = vmatprep.subr.mxu0 0.0
    %93 = vmatpush1.xpose.msra.mxu0 %v82
    %94 = vmatprep.subr.mxu0 0.0
    %95 = vmatpush1.xpose.msra.mxu0 %v83
    %96 = vmatprep.subr.mxu0 0.0
    %97 = vmatpush1.xpose.msra.mxu0 %v84
    %98 = vmatprep.subr.mxu0 0.0
    %99 = vmatpush1.xpose.msra.mxu0 %v85
    %100 = vmatprep.subr.mxu0 0.0
    %101 = vmatpush1.xpose.msra.mxu0 %v86
    %102 = vmatprep.subr.mxu0 0.0
    %103 = vmatpush1.xpose.msra.mxu0 %v87
    %104 = vmatprep.subr.mxu0 0.0
    %105 = vmatpush1.xpose.msra.mxu0 0.0
    %106 = vmatprep.subr.mxu0 0.0
    %107 = vmatpush1.xpose.msra.mxu0 0.0
    %108 = vmatprep.subr.mxu0 0.0
    %109 = vmatpush1.xpose.msra.mxu0 0.0
    %110 = vmatprep.subr.mxu0 0.0
    %111 = vmatpush1.xpose.msra.mxu0 0.0
    %112 = vmatprep.subr.mxu0 0.0
    %113 = vmatpush1.xpose.msra.mxu0 0.0
    %114 = vmatprep.subr.mxu0 0.0
    %115 = vmatpush1.xpose.msra.mxu0 0.0
    %116 = vmatprep.subr.mxu0 0.0
    %117 = vmatpush1.xpose.msra.mxu0 0.0
    %118 = vmatprep.subr.mxu0 0.0
    %119 = vmatpush1.xpose.msra.mxu0 0.0
    %120 = vmatprep.subr.mxu0 0.0
    %121 = vmatpush1.xpose.msra.mxu0 0.0
    %122 = vmatprep.subr.mxu0 0.0
    %123 = vmatpush1.xpose.msra.mxu0 0.0
    %124 = vmatprep.subr.mxu0 0.0
    %125 = vmatpush1.xpose.msra.mxu0 0.0
    %126 = vmatprep.subr.mxu0 0.0
    %127 = vmatpush1.xpose.msra.mxu0 0.0
    %128 = vmatprep.subr.mxu0 0.0
    %129 = vmatpush1.xpose.msra.mxu0 0.0
    %130 = vmatprep.subr.mxu0 0.0
    %131 = vmatpush1.xpose.msra.mxu0 0.0
    %132 = vmatprep.subr.mxu0 0.0
    %133 = vmatpush1.xpose.msra.mxu0 0.0
    %134 = vmatprep.subr.mxu0 0.0
    %135 = vmatpush1.xpose.msra.mxu0 0.0
    %136 = vmatprep.subr.mxu0 0.0
    %137 = vmatpush1.xpose.msra.mxu0 0.0
    %138 = vmatprep.subr.mxu0 0.0
    %139 = vmatpush1.xpose.msra.mxu0 0.0
    %140 = vmatprep.subr.mxu0 0.0
    %141 = vmatpush1.xpose.msra.mxu0 0.0
    %142 = vmatprep.subr.mxu0 0.0
    %143 = vmatpush1.xpose.msra.mxu0 0.0
    %144 = vmatprep.subr.mxu0 0.0
    %145 = vmatpush1.xpose.msra.mxu0 0.0
    %146 = vmatprep.subr.mxu0 0.0
    %147 = vmatpush1.xpose.msra.mxu0 0.0
    %148 = vmatprep.subr.mxu0 0.0
    %149 = vmatpush1.xpose.msra.mxu0 0.0
    %150 = vmatprep.subr.mxu0 0.0
    %151 = vmatpush1.xpose.msra.mxu0 0.0
    %152 = vmatprep.mubr.f32.mxu0 0.0
    %153 = vmatmul.mubr.f32.gmra.mrb[0].mxu0 1.0
    %v154 = vpop.f32.mrb[0].mxu0
    %v155 = vadd.f32 0.0, %v154
    %v156 = vpop.f32.mrb[0].mxu0
    %157 = vdwg.mxu0
    %158 = vmatprep.subr.mxu0 0.0
    %159 = vmatpush1.xpose.msra.mxu0 %v48
    %160 = vmatprep.subr.mxu0 0.0
    %161 = vmatpush1.xpose.msra.mxu0 %v49
    %162 = vmatprep.subr.mxu0 0.0
    %163 = vmatpush1.xpose.msra.mxu0 %v50
    %164 = vmatprep.subr.mxu0 0.0
    %165 = vmatpush1.xpose.msra.mxu0 %v51
    %166 = vmatprep.subr.mxu0 0.0
    %167 = vmatpush1.xpose.msra.mxu0 %v52
    %168 = vmatprep.subr.mxu0 0.0
    %169 = vmatpush1.xpose.msra.mxu0 %v53
    %170 = vmatprep.subr.mxu0 0.0
    %171 = vmatpush1.xpose.msra.mxu0 %v54
    %172 = vmatprep.subr.mxu0 0.0
    %173 = vmatpush1.xpose.msra.mxu0 %v55
    %174 = vmatprep.subr.mxu0 0.0
    %175 = vmatpush1.xpose.msra.mxu0 0.0
    %176 = vmatprep.subr.mxu0 0.0
    %177 = vmatpush1.xpose.msra.mxu0 0.0
    %178 = vmatprep.subr.mxu0 0.0
    %179 = vmatpush1.xpose.msra.mxu0 0.0
    %180 = vmatprep.subr.mxu0 0.0
    %181 = vmatpush1.xpose.msra.mxu0 0.0
    %182 = vmatprep.subr.mxu0 0.0
    %183 = vmatpush1.xpose.msra.mxu0 0.0
    %184 = vmatprep.subr.mxu0 0.0
    %185 = vmatpush1.xpose.msra.mxu0 0.0
    %186 = vmatprep.subr.mxu0 0.0
    %187 = vmatpush1.xpose.msra.mxu0 0.0
    %188 = vmatprep.subr.mxu0 0.0
    %189 = vmatpush1.xpose.msra.mxu0 0.0
    %190 = vmatprep.subr.mxu0 0.0
    %191 = vmatpush1.xpose.msra.mxu0 0.0
    %192 = vmatprep.subr.mxu0 0.0
    %193 = vmatpush1.xpose.msra.mxu0 0.0
    %194 = vmatprep.subr.mxu0 0.0
    %195 = vmatpush1.xpose.msra.mxu0 0.0
    %196 = vmatprep.subr.mxu0 0.0
    %197 = vmatpush1.xpose.msra.mxu0 0.0
    %198 = vmatprep.subr.mxu0 0.0
    %199 = vmatpush1.xpose.msra.mxu0 0.0
    %200 = vmatprep.subr.mxu0 0.0
    %201 = vmatpush1.xpose.msra.mxu0 0.0
    %202 = vmatprep.subr.mxu0 0.0
    %203 = vmatpush1.xpose.msra.mxu0 0.0
    %204 = vmatprep.subr.mxu0 0.0
    %205 = vmatpush1.xpose.msra.mxu0 0.0
    %206 = vmatprep.subr.mxu0 0.0
    %207 = vmatpush1.xpose.msra.mxu0 0.0
    %208 = vmatprep.subr.mxu0 0.0
    %209 = vmatpush1.xpose.msra.mxu0 0.0
    %210 = vmatprep.subr.mxu0 0.0
    %211 = vmatpush1.xpose.msra.mxu0 0.0
    %212 = vmatprep.subr.mxu0 0.0
    %213 = vmatpush1.xpose.msra.mxu0 0.0
    %214 = vmatprep.subr.mxu0 0.0
    %215 = vmatpush1.xpose.msra.mxu0 0.0
    %216 = vmatprep.subr.mxu0 0.0
    %217 = vmatpush1.xpose.msra.mxu0 0.0
    %218 = vmatprep.subr.mxu0 0.0
    %219 = vmatpush1.xpose.msra.mxu0 0.0
    %220 = vmatprep.subr.mxu0 0.0
    %221 = vmatpush1.xpose.msra.mxu0 0.0
    %222 = vmatprep.mubr.f32.mxu0 0.0
    %223 = vmatmul.mubr.f32.gmra.mrb[0].mxu0 %v40
    %v224 = vpop.f32.mrb[0].mxu0
    %v225 = vadd.f32 0.0, %v224
    %v226 = vpop.f32.mrb[0].mxu0
    %227 = vmatprep.mubr.f32.mxu0 0.0
    %228 = vmatmul.mubr.f32.gmra.mrb[0].mxu0 %v41
    %v229 = vpop.f32.mrb[0].mxu0
    %v230 = vadd.f32 0.0, %v229
    %v231 = vpop.f32.mrb[0].mxu0
    %232 = vmatprep.mubr.f32.mxu0 0.0
    %233 = vmatmul.mubr.f32.gmra.mrb[0].mxu0 %v42
    %v234 = vpop.f32.mrb[0].mxu0
    %v235 = vadd.f32 0.0, %v234
    %v236 = vpop.f32.mrb[0].mxu0
    %237 = vmatprep.mubr.f32.mxu0 0.0
    %238 = vmatmul.mubr.f32.gmra.mrb[0].mxu0 %v43
    %v239 = vpop.f32.mrb[0].mxu0
    %v240 = vadd.f32 0.0, %v239
    %v241 = vpop.f32.mrb[0].mxu0
    %242 = vmatprep.mubr.f32.mxu0 0.0
    %243 = vmatmul.mubr.f32.gmra.mrb[0].mxu0 %v44
    %v244 = vpop.f32.mrb[0].mxu0
    %v245 = vadd.f32 0.0, %v244
    %v246 = vpop.f32.mrb[0].mxu0
    %247 = vmatprep.mubr.f32.mxu0 0.0
    %248 = vmatmul.mubr.f32.gmra.mrb[0].mxu0 %v45
    %v249 = vpop.f32.mrb[0].mxu0
    %v250 = vadd.f32 0.0, %v249
    %v251 = vpop.f32.mrb[0].mxu0
    %252 = vmatprep.mubr.f32.mxu0 0.0
    %253 = vmatmul.mubr.f32.gmra.mrb[0].mxu0 %v46
    %v254 = vpop.f32.mrb[0].mxu0
    %v255 = vadd.f32 0.0, %v254
    %v256 = vpop.f32.mrb[0].mxu0
    %257 = vmatprep.mubr.f32.mxu0 0.0
    %258 = vmatmul.mubr.f32.gmra.mrb[0].mxu0 %v47
    %v259 = vpop.f32.mrb[0].mxu0
    %v260 = vadd.f32 0.0, %v259
    %v261 = vpop.f32.mrb[0].mxu0
    %262 = vdwg.mxu0
    %v263 = vlaneseq
    %v264 = vshrl.u32 %v263, 7
    %v265 = vsub.s32 0, %v264
    %v266 = vrot.slane %v155, %v265
    %v267 = vadd.f32 %v65, %v266
    %v268 = vadd.f32 %v67, %v266
    %v269 = vadd.f32 %v69, %v266
    %v270 = vadd.f32 %v71, %v266
    %v271 = vadd.f32 %v73, %v266
    %v272 = vadd.f32 %v75, %v266
    %v273 = vadd.f32 %v77, %v266
    %v274 = vadd.f32 %v79, %v266
    %v275 = vmul.f32 %v225, 2.0
    %v276 = vmul.f32 %v230, 2.0
    %v277 = vmul.f32 %v235, 2.0
    %v278 = vmul.f32 %v240, 2.0
    %v279 = vmul.f32 %v245, 2.0
    %v280 = vmul.f32 %v250, 2.0
    %v281 = vmul.f32 %v255, 2.0
    %v282 = vmul.f32 %v260, 2.0
    %v283 = vsub.f32 %v267, %v275
    %v284 = vsub.f32 %v268, %v276
    %v285 = vsub.f32 %v269, %v277
    %v286 = vsub.f32 %v270, %v278
    %v287 = vsub.f32 %v271, %v279
    %v288 = vsub.f32 %v272, %v280
    %v289 = vsub.f32 %v273, %v281
    %v290 = vsub.f32 %v274, %v282
    %v291 = vmax.f32 %v283, 0.0
    %v292 = vmax.f32 %v284, 0.0
    %v293 = vmax.f32 %v285, 0.0
    %v294 = vmax.f32 %v286, 0.0
    %v295 = vmax.f32 %v287, 0.0
    %v296 = vmax.f32 %v288, 0.0
    %v297 = vmax.f32 %v289, 0.0
    %v298 = vmax.f32 %v290, 0.0
    %vm299 = vcmask 523264
    %300 = vst.msk [vmem:[#allocation7] sm:$0xff] %vm299, %v291
    %301 = vst.msk [vmem:[#allocation7 + $0x8] sm:$0xff] %vm299, %v292
    %302 = vst.msk [vmem:[#allocation7 + $0x10] sm:$0xff] %vm299, %v293
    %303 = vst.msk [vmem:[#allocation7 + $0x18] sm:$0xff] %vm299, %v294
    %304 = vst.msk [vmem:[#allocation7 + $0x20] sm:$0xff] %vm299, %v295
    %305 = vst.msk [vmem:[#allocation7 + $0x28] sm:$0xff] %vm299, %v296
    %306 = vst.msk [vmem:[#allocation7 + $0x30] sm:$0xff] %vm299, %v297
    %307 = vst.msk [vmem:[#allocation7 + $0x38] sm:$0xff] %vm299, %v298
    // Predicated region
    $region18: #{tpu_custom_call.1} parent=1 // pred_check
      _
    $region19: #{tpu_custom_call.1} parent=1 // pred_check_branch
      %309 = sbr.rel (0) target = $region21
    $region20: #{tpu_custom_call.1} parent=1 // pred_region
      %s311 = ssub.s32 1024, 1024
      %312 = vsyncadd [#allocation4], %s311
      %s313 = sshll.u32 [#allocation7], 4
      %s314 = int_to_ptr.vmem [resolvable:$true] %s313
      %319 = dma.vmem_to_hbm [thread:$0]  %s314, 1024, %s2, [#allocation4], 128, 128, 8
    $region21: #{tpu_custom_call.1} parent=1 // pred_fallthru
      _
    // Predicated region
    $region22: #{tpu_custom_call.1} parent=1 // pred_check
      _
    $region23: #{tpu_custom_call.1} parent=1 // pred_check_branch
      %321 = sbr.rel (0) target = $region25
    $region24: #{tpu_custom_call.1} parent=1 // pred_region
      %322 = dma.done [#allocation4], 1024
    $region25: #{tpu_custom_call.1} parent=1 // pred_fallthru
      _
    %323 = vsyncpa [#allocation3], 1
    %324 = vsyncpa [#allocation6], 1
    %325 = vsyncpa [#allocation4], 1

</llo_original>
